<compile_context>
chip_gen: v6e
topology: v6e:2x2x1
jax: 0.10.0
libtpu: 0.0.40
codegen_flags: <defaults>
</compile_context>

<pallas_src>
import jax
import jax.numpy as jnp
from jax.experimental import pallas as pl
from jax.experimental.pallas import tpu as pltpu


def _round_up(x, m):
    return (x + m - 1) // m * m


def _make_pool_kernel(hw_total, t_r, t_hw, n_hw):
    """Streaming per-row spatial max over a (B*C, H*W) array."""
    rem = hw_total - (n_hw - 1) * t_hw          # valid columns in the final hw tile
    needs_mask = rem != t_hw
    n_lane_groups = t_hw // 128                 # t_hw is always a multiple of 128

    def _lane_max_update(x, acc_ref):
        # Pure elementwise (VPU) max over 128-lane slices; no cross-lane work here.
        acc = acc_ref[...]
        for j in range(n_lane_groups):
            acc = jnp.maximum(acc, x[:, j * 128:(j + 1) * 128])
        acc_ref[...] = acc

    def kernel(x_ref, o_ref, acc_ref):
        hw_idx = pl.program_id(1)
        last = pl.num_programs(1) - 1

        @pl.when(hw_idx == 0)
        def _init():
            acc_ref[...] = jnp.full(acc_ref.shape, -jnp.inf, acc_ref.dtype)

        if needs_mask:
            @pl.when(hw_idx != last)
            def _body():
                _lane_max_update(x_ref[...], acc_ref)

            @pl.when(hw_idx == last)
            def _body_masked():
                x = x_ref[...]
                col = jax.lax.broadcasted_iota(jnp.int32, x.shape, 1)
                fill = jnp.asarray(-jnp.inf, dtype=x.dtype)   # dtype-matched fill
                _lane_max_update(jnp.where(col < rem, x, fill), acc_ref)
        else:
            _lane_max_update(x_ref[...], acc_ref)

        @pl.when(hw_idx == last)
        def _finalize():
            # Single cross-lane (XLU) reduce, once per row tile.
            o_ref[...] = jnp.max(
                acc_ref[...].astype(jnp.float32), axis=-1, keepdims=True
            ).astype(o_ref.dtype)

    return kernel


def channel_attention(x, w1, w2, *, t_hw=2048, t_r=512):
    """x: (B, C, H, W); w1: (C//4, C); w2: (C, C//4). Returns (B, C, 1, 1)."""
    B, C, H, W = x.shape
    R, HW = B * C, H * W

    # Lane dim: multiple of 128, capped; sublane dim: multiple of 8, capped.
    t_hw = min(t_hw, _round_up(HW, 128))
    t_r = min(t_r, _round_up(R, 8))
    # Give the "parallel" row axis >= 2 blocks when rows allow it (v7x megacore).
    if pl.cdiv(R, t_r) < 2 and R >= 16:
        t_r = _round_up(pl.cdiv(R, 2), 8)

    n_r = pl.cdiv(R, t_r)       # last row block may be partial (OOB rows dropped below)
    n_hw = pl.cdiv(HW, t_hw)    # last hw block masked inside the kernel

    xf = x.reshape(R, HW)       # fold (B, C) so rows pack full 8-sublane vregs

    pooled = pl.pallas_call(
        _make_pool_kernel(HW, t_r, t_hw, n_hw),
        out_shape=jax.ShapeDtypeStruct((R, 1), jnp.float32),
        grid_spec=pltpu.PrefetchScalarGridSpec(
            num_scalar_prefetch=0,
            grid=(n_r, n_hw),
            in_specs=[pl.BlockSpec((t_r, t_hw), lambda r, h: (r, h))],
            out_specs=pl.BlockSpec((t_r, 1), lambda r, h: (r, 0)),
            scratch_shapes=[pltpu.VMEM((t_r, 128), x.dtype)],
        ),
        compiler_params=pltpu.CompilerParams(
            dimension_semantics=("parallel", "arbitrary"),
            vmem_limit_bytes=48 * 1024 * 1024,
        ),
    )(xf)

    # Squeeze/excite epilogue in plain JAX (tiny matmuls, XLA fuses them).
    m = pooled[:R, 0].reshape(B, C).astype(jnp.float32)
    h = jnp.maximum(m @ w1.astype(jnp.float32).T, 0.0)          # fc1 + ReLU
    y = h @ w2.astype(jnp.float32).T                            # fc2
    att = jax.nn.sigmoid(y).astype(x.dtype)                     # sigmoid
    return att.reshape(B, C, 1, 1)


def channel_attention_ref(x, w1, w2):
    """Pure-JAX reference mirroring the PyTorch forward."""
    m = jnp.max(x, axis=(2, 3), keepdims=True)                  # AdaptiveMaxPool2d(1)
    h = jnp.einsum('oc,bcij->boij', w1, m)                      # fc1 (1x1 conv, no bias)
    h = jnp.maximum(h, 0.0)                                     # ReLU
    y = jnp.einsum('oc,bcij->boij', w2, h)                      # fc2 (1x1 conv, no bias)
    return jax.nn.sigmoid(y)


if __name__ == "__main__":
    key = jax.random.PRNGKey(0)
    k_x, k_w1, k_w2 = jax.random.split(key, 3)

    B, C, H, W = 2, 4, 16, 16
    C4 = C // 4

    x = jax.random.normal(k_x, (B, C, H, W), dtype=jnp.float32)
    # Conv2d 1x1, bias=False: weights of shape (C//4, C) and (C, C//4).
    w1 = 0.1 * jax.random.normal(k_w1, (C4, C), dtype=jnp.float32)
    w2 = 0.1 * jax.random.normal(k_w2, (C, C4), dtype=jnp.float32)

    out = jax.jit(channel_attention)(x, w1, w2)
    out = jax.block_until_ready(out)

    ref = channel_attention_ref(x, w1, w2)
    assert out.shape == (B, C, 1, 1), out.shape
    assert jnp.allclose(out, ref, atol=1e-5, rtol=1e-5), "mismatch vs reference"

    print("KERNEL_OK")
</pallas_src>

<mosaic_0001>
module attributes {stable_mosaic.version = 11 : i64} {
  func.func @kernel(%arg0: i32, %arg1: i32, %arg2: memref<8x256xf32, #tpu.memory_space<vmem>>, %arg3: memref<8x1xf32, #tpu.memory_space<vmem>>, %arg4: memref<8x128xf32, #tpu.memory_space<vmem>>) attributes {dimension_semantics = [#tpu.dimension_semantics<parallel>, #tpu.dimension_semantics<arbitrary>], iteration_bounds = array<i64: 1, 1>, scalar_prefetch = 0 : i64, scratch_operands = 1 : i64, tpu.core_type = #tpu.core_type<tc>, window_params = [{transform_indices = @transform_0, window_bounds = array<i64: 8, 256>}, {transform_indices = @transform_1, window_bounds = array<i64: 8, 1>}]} {
    %c0_i32 = arith.constant 0 : i32
    %0 = arith.cmpi eq, %arg1, %c0_i32 : i32
    %1 = arith.extui %0 : i1 to i32
    %c0_i32_0 = arith.constant 0 : i32
    %2 = arith.cmpi ne, %1, %c0_i32_0 : i32
    scf.if %2 {
      %cst = arith.constant 0xFF800000 : f32
      %13 = vector.broadcast %cst : f32 to vector<8x128xf32>
      %c0_8 = arith.constant 0 : index
      %c0_9 = arith.constant 0 : index
      %14 = vector.load %arg4[%c0_8, %c0_9] : memref<8x128xf32, #tpu.memory_space<vmem>>, vector<8x128xf32>
      tpu.vector_store %arg4[%c0_8, %c0_9], %13 {strides = array<i32>} : memref<8x128xf32, #tpu.memory_space<vmem>>, vector<8x128xf32>,
    } else {
    }
    %c0 = arith.constant 0 : index
    %c0_1 = arith.constant 0 : index
    %3 = vector.load %arg2[%c0, %c0_1] : memref<8x256xf32, #tpu.memory_space<vmem>>, vector<8x256xf32>
    %c0_2 = arith.constant 0 : index
    %c0_3 = arith.constant 0 : index
    %4 = vector.load %arg4[%c0_2, %c0_3] : memref<8x128xf32, #tpu.memory_space<vmem>>, vector<8x128xf32>
    %5 = vector.extract_strided_slice %3 {offsets = [0, 0], sizes = [8, 128], strides = [1, 1]} : vector<8x256xf32> to vector<8x128xf32>
    %6 = arith.maximumf %4, %5 : vector<8x128xf32>
    %7 = vector.extract_strided_slice %3 {offsets = [0, 128], sizes = [8, 128], strides = [1, 1]} : vector<8x256xf32> to vector<8x128xf32>
    %8 = arith.maximumf %6, %7 : vector<8x128xf32>
    %c0_4 = arith.constant 0 : index
    %c0_5 = arith.constant 0 : index
    %9 = vector.load %arg4[%c0_4, %c0_5] : memref<8x128xf32, #tpu.memory_space<vmem>>, vector<8x128xf32>
    tpu.vector_store %arg4[%c0_4, %c0_5], %8 {strides = array<i32>} : memref<8x128xf32, #tpu.memory_space<vmem>>, vector<8x128xf32>,
    %c0_i32_6 = arith.constant 0 : i32
    %10 = arith.cmpi eq, %arg1, %c0_i32_6 : i32
    %11 = arith.extui %10 : i1 to i32
    %c0_i32_7 = arith.constant 0 : i32
    %12 = arith.cmpi ne, %11, %c0_i32_7 : i32
    scf.if %12 {
      %c0_8 = arith.constant 0 : index
      %c0_9 = arith.constant 0 : index
      %13 = vector.load %arg4[%c0_8, %c0_9] : memref<8x128xf32, #tpu.memory_space<vmem>>, vector<8x128xf32>
      %cst = arith.constant dense<0xFF800000> : vector<8xf32>
      %14 = vector.multi_reduction <maximumf>, %13, %cst [1] : vector<8x128xf32> to vector<8xf32>
      %15 = vector.shape_cast %14 : vector<8xf32> to vector<8x1xf32>
      %c0_10 = arith.constant 0 : index
      %c0_11 = arith.constant 0 : index
      %16 = vector.load %arg3[%c0_10, %c0_11] : memref<8x1xf32, #tpu.memory_space<vmem>>, vector<8x1xf32>
      tpu.vector_store %arg3[%c0_10, %c0_11], %15 {strides = array<i32>} : memref<8x1xf32, #tpu.memory_space<vmem>>, vector<8x1xf32>,
    } else {
    }
    return
  }
  func.func @transform_0(%arg0: i32, %arg1: i32) -> (i32, i32) {
    %c0_i32 = arith.constant 0 : i32
    return %arg0, %arg1 : i32, i32
  }
  func.func @transform_1(%arg0: i32, %arg1: i32) -> (i32, i32) {
    %c0_i32 = arith.constant 0 : i32
    %c0_i32_0 = arith.constant 0 : i32
    return %arg0, %c0_i32 : i32, i32
  }
}

</mosaic_0001>

<llo_original>
// kernel: squeeze.1
$region0: #{squeeze.1}
  %s0 = inlined_call_operand.vmem [shape: f32[8], index: 0, kind: input, shape index: {}]
  %s1 = inlined_call_operand.vmem [shape: f32[2,4], index: 1, kind: output, shape index: {}]
  $region1: #{squeeze.1} parent=0
    #allocation0 [shape = 'u8[4096]{0}', space=vmem, size = 0x1000, scoped, tag = 'scoped mem for output reshape']
    #allocation1 [shape = 'u8[4096]{0}', space=vmem, size = 0x1000, scoped, tag = 'scoped mem for input reshape']
    %s3 = sshll.u32 1, 1
    %s4 = ssub.s32 %s3, 1
    %v5 = vld [vmem:[%s0] sm:%s4]
    %6 = vst [vmem:[#allocation1] sm:%s4] %v5
    %v7 = vld [vmem:[#allocation1] sm:$0x1]
    %vm8 = vcmask 31744
    %9 = vst.msk [vmem:[#allocation0] sm:$0x1] %vm8, %v7
    %v10 = vld [vmem:[#allocation1] sm:$0x1]
    %11 = vrot.lane.b32.xlu0 %v10, 124
    %v12 = vpop.permute.xlu0 %11
    %vm13 = vcmask 31744
    %s14 = scalar_lea.vmem [#allocation0], 1
    %15 = vst.msk [vmem:[%s14] sm:$0x1] %vm13, %v12
    %s17 = sshll.u32 1, 2
    %s18 = ssub.s32 %s17, 1
    %v20 = vld [vmem:[#allocation0] sm:%s18]
    %s21 = sshll.u32 1, 2
    %s22 = ssub.s32 %s21, 1
    %23 = vst [vmem:[%s1] sm:%s22] %v20

// kernel: channel_attention.1
$region0: #{channel_attention.1}
  #allocation0 [shape = 'u32[]', space=smem, size = 0x4, offset = 0x4, fixed_abs, tag = 'smem constant byte address 0x4 - core index']
  #allocation1 [shape = 'u32[144,128]{1,0:T(1,128)}', space=vmem, size = 0x12000, scoped, tag = 'internal scratch']
  #allocation2 [shape = 'f32[8,128]{1,0:T(8,128)}', space=vmem, size = 0x1000, scoped, tag = 'scratch operand']
  %s0 = inlined_call_operand.vmem [shape: f32[8,256], index: 0, kind: input, shape index: {}]
  %s1 = inlined_call_operand.vmem [shape: f32[8,1], index: 1, kind: output, shape index: {}]
  %s2 = sld [smem:[#allocation0]]
  $region22: #{channel_attention.1} parent=0
    _
  %s4 = ssub.s32 1, %s2
  %s5 = scalar_select 0, %s4, %s2
  // Predicated region
  $region2: #{channel_attention.1} parent=0 // pred_check
    _
  $region3: #{channel_attention.1} parent=0 // pred_check_branch
    %7 = sbr.rel (0) target = $region5
  $region4: #{channel_attention.1} parent=0 // pred_region
    _
  $region5: #{channel_attention.1} parent=0 // pred_fallthru
    _
  %p8 = scmp.eq.s32.totalorder 0, 0
  // Predicated region
  $region6: #{channel_attention.1} parent=0 // pred_check
    %p9 = pneg %p8
  $region7: #{channel_attention.1} parent=0 // pred_check_branch
    %11 = sbr.rel (%p9) target = $region9
  $region8: #{channel_attention.1} parent=0 // pred_region
    %12 = vst [vmem:[#allocation2] sm:$0xff] -inf
  $region9: #{channel_attention.1} parent=0 // pred_fallthru
    _
  %v13 = vld [vmem:[%s0] sm:$0xff]
  %v14 = vld [vmem:[%s0 + $0x8] sm:$0xff]
  %v15 = vld [vmem:[#allocation2] sm:$0xff]
  %v16 = vmax.f32 %v15, %v13
  %v17 = vmax.f32 %v16, %v14
  %18 = vst [vmem:[#allocation2] sm:$0xff] %v17
  // Predicated region
  $region10: #{channel_attention.1} parent=0 // pred_check
    %p19 = pneg %p8
  $region11: #{channel_attention.1} parent=0 // pred_check_branch
    %21 = sbr.rel (%p19) target = $region13
  $region12: #{channel_attention.1} parent=0 // pred_region
    %v22 = vld [vmem:[#allocation2] sm:$0xff]
    %23 = vmax.xlane.f32.xlu0 %v22
    %v24 = vpop.xlane.xlu0 %23
    %vm25 = vcmask 7168
    %26 = vst.msk [vmem:[%s1] sm:$0xff] %vm25, %v24
  $region13: #{channel_attention.1} parent=0 // pred_fallthru
    _
  // Predicated region
  $region14: #{channel_attention.1} parent=0 // pred_check
    _
  $region15: #{channel_attention.1} parent=0 // pred_check_branch
    %28 = sbr.rel (0) target = $region17
  $region16: #{channel_attention.1} parent=0 // pred_region
    _
  $region17: #{channel_attention.1} parent=0 // pred_fallthru
    _
  // Predicated region
  $region18: #{channel_attention.1} parent=0 // pred_check
    _
  $region19: #{channel_attention.1} parent=0 // pred_check_branch
    %30 = sbr.rel (0) target = $region21
  $region20: #{channel_attention.1} parent=0 // pred_region
    _
  $region21: #{channel_attention.1} parent=0 // pred_fallthru
    _

</llo_original>
